<compile_context>
chip_gen: v7x
topology: tpu7x:2x2x1
jax: 0.10.0
libtpu: 0.0.40
codegen_flags: <defaults>
</compile_context>

<pallas_src>
import jax
import jax.numpy as jnp
from jax.experimental import pallas as pl
from jax.experimental.pallas import tpu as pltpu


def _round_up(x, m):
    return ((x + m - 1) // m) * m


def _vmem_limit(resident_bytes):
    """Scoped-VMEM limit sized from actual resident buffers + margin."""
    return int(min(max(resident_bytes * 2 + (4 << 20), 16 << 20), 100 << 20))


# ---------------------------------------------------------------------------
# Tiled matmul + bias:  (M, K) @ (K, N) + (1, N) -> (M, N)  (f32 accumulate)
# Both grid axes are independent -> "parallel" (megacore-shardable on v7x).
# M / N are padded up to a multiple of the chosen tile (never a full-dim
# fallback), so awkward sizes can't blow up block sizes / VMEM.
# ---------------------------------------------------------------------------
def _matmul_bias_kernel(x_ref, w_ref, b_ref, o_ref):
    o_ref[...] = (jnp.dot(x_ref[...], w_ref[...],
                          preferred_element_type=jnp.float32)
                  + b_ref[...]).astype(o_ref.dtype)


def _matmul_bias(x, w, b, *, max_tm=256, max_tn=512):
    M, K = x.shape
    K2, N = w.shape
    assert K == K2
    tm = min(max_tm, _round_up(M, 8))
    tn = min(max_tn, _round_up(N, 128))
    Mp = _round_up(M, tm)
    Np = _round_up(N, tn)

    xp = jnp.pad(x, ((0, Mp - M), (0, 0))) if Mp != M else x
    wp = jnp.pad(w, ((0, 0), (0, Np - N))) if Np != N else w
    bp = b.reshape(1, N)
    if Np != N:
        bp = jnp.pad(bp, ((0, 0), (0, Np - N)))

    resident = (2 * tm * K * xp.dtype.itemsize      # x tile (double-buffered)
                + 2 * K * tn * wp.dtype.itemsize    # w tile
                + 2 * tn * bp.dtype.itemsize        # bias tile
                + 2 * tm * tn * 4)                  # f32 out tile

    out = pl.pallas_call(
        _matmul_bias_kernel,
        out_shape=jax.ShapeDtypeStruct((Mp, Np), jnp.float32),
        grid_spec=pltpu.PrefetchScalarGridSpec(
            num_scalar_prefetch=0,
            grid=(Mp // tm, Np // tn),
            in_specs=[
                pl.BlockSpec((tm, K), lambda i, j: (i, 0)),
                pl.BlockSpec((K, tn), lambda i, j: (0, j)),
                pl.BlockSpec((1, tn), lambda i, j: (0, j)),
            ],
            out_specs=pl.BlockSpec((tm, tn), lambda i, j: (i, j)),
        ),
        compiler_params=pltpu.CompilerParams(
            dimension_semantics=("parallel", "parallel"),
            vmem_limit_bytes=_vmem_limit(resident)),
    )(xp, wp, bp)
    if Mp != M or Np != N:
        out = out[:M, :N]
    return out


# ---------------------------------------------------------------------------
# Recurrent LSTM core, streamed over T-chunks.
#   grid = (batch_blocks, T_chunks), dims = ("parallel", "arbitrary")
#   gx_ref : (Tc, tb, 4*Hp)  f32   precomputed x @ W_ih + (b_ih + b_hh)
#   whh_ref: (Hp, 4*Hp)      bf16  (f32 accumulation on the MXU)
#   hs_ref : (Tc, tb, Hp)    f32   hidden states for this chunk
#   h/c scratch persist across the T axis; re-zeroed at each batch block.
# Padded gate layout is [i, f, o, g] so one sigmoid covers the first 3*Hp
# lanes and one tanh covers the last Hp block (fewer EUP op sequences).
# ---------------------------------------------------------------------------
def _lstm_recurrent_kernel(gx_ref, whh_ref, hs_ref, h_scr, c_scr):
    Tc = gx_ref.shape[0]
    Hp = h_scr.shape[1]

    @pl.when(pl.program_id(1) == 0)
    def _():
        h_scr[...] = jnp.zeros_like(h_scr)
        c_scr[...] = jnp.zeros_like(c_scr)

    def step(t, carry):
        h = h_scr[...]
        c = c_scr[...]
        gates = gx_ref[t] + jnp.dot(h.astype(whh_ref.dtype), whh_ref[...],
                                    preferred_element_type=jnp.float32)
        sig = jax.nn.sigmoid(gates[:, :3 * Hp])      # one fused sigmoid slab
        i_g = sig[:, 0 * Hp:1 * Hp]
        f_g = sig[:, 1 * Hp:2 * Hp]
        o_g = sig[:, 2 * Hp:3 * Hp]
        g_g = jnp.tanh(gates[:, 3 * Hp:4 * Hp])
        c_new = f_g * c + i_g * g_g
        h_new = o_g * jnp.tanh(c_new)
        c_scr[...] = c_new
        h_scr[...] = h_new
        hs_ref[t] = h_new
        return carry

    jax.lax.fori_loop(0, Tc, step, 0, unroll=min(4, Tc))


def _pad_gates_last(w, H, Hp, order=(0, 1, 3, 2)):
    """Pad the last (4H) axis gate-block-wise to 4*Hp.  PyTorch gate order is
    [i, f, g, o]; `order` re-lays them out as [i, f, o, g] so sigmoid gates
    are contiguous.  Each gate lands in its own lane-aligned block of Hp."""
    parts = []
    for k in order:
        g = w[..., k * H:(k + 1) * H]
        pad = [(0, 0)] * (w.ndim - 1) + [(0, Hp - H)]
        parts.append(jnp.pad(g, pad))
    return jnp.concatenate(parts, axis=-1)


def decoder_rnn_forward(features, captions, params,
                        matmul_dtype=jnp.bfloat16):
    """features: (B, E) f32; captions: (B, S) int32.  Returns (B, S, V) f32."""
    md = matmul_dtype
    emb = params["embedding"][captions[:, :-1]]                 # (B, S-1, E)
    x = jnp.concatenate([features[:, None, :], emb], axis=1)    # (B, T, E)
    x = x.astype(jnp.float32)
    B, T, E = x.shape
    H = params["W_hh"].shape[0]
    V = params["W_out"].shape[1]

    # Padded sizes (zero padding keeps the math exact on real rows/cols).
    Bp = _round_up(max(B, 8), 8)        # sublane-aligned batch
    Hp = _round_up(H, 128)              # lane-aligned gate blocks
    if Bp >= 16:                        # 2 batch blocks -> megacore on v7x
        Bp = _round_up(Bp, 16)
        tb = Bp // 2
    else:
        tb = Bp
    if T <= 8:
        Tc = T
    else:
        Tc = 16 if T >= 32 else 8
    Tp = _round_up(T, Tc)

    f32 = jnp.float32
    w_ih = _pad_gates_last(params["W_ih"].astype(md), H, Hp)         # (E, 4Hp)
    w_hh = _pad_gates_last(params["W_hh"].astype(md), H, Hp)         # (H, 4Hp)
    w_hh = jnp.pad(w_hh, ((0, Hp - H), (0, 0)))                      # (Hp, 4Hp)
    b = _pad_gates_last(params["b"].astype(f32), H, Hp)              # (1, 4Hp)
    w_out = jnp.pad(params["W_out"].astype(md), ((0, Hp - H), (0, 0)))  # (Hp, V)
    b_out = params["b_out"].astype(f32)                              # (1, V)

    # ---- stage 1: input projection for all timesteps (parallel matmul) ----
    x_tm = jnp.transpose(x, (1, 0, 2))                               # (T, B, E)
    x_tm = jnp.pad(x_tm, ((0, Tp - T), (0, Bp - B), (0, 0)))         # (Tp, Bp, E)
    gates_x = _matmul_bias(x_tm.reshape(Tp * Bp, E).astype(md), w_ih, b)
    gates_x = gates_x.reshape(Tp, Bp, 4 * Hp)                        # f32

    # ---- stage 2: sequential recurrence, streamed over T-chunks -----------
    nb, nt = Bp // tb, Tp // Tc
    resident2 = (2 * Tc * tb * 4 * Hp * 4                    # gx chunks
                 + 2 * Hp * 4 * Hp * jnp.dtype(md).itemsize  # W_hh
                 + 2 * Tc * tb * Hp * 4                      # hs chunks
                 + 2 * tb * Hp * 4)                          # h, c scratch
    hs = pl.pallas_call(
        _lstm_recurrent_kernel,
        out_shape=jax.ShapeDtypeStruct((Tp, Bp, Hp), jnp.float32),
        grid_spec=pltpu.PrefetchScalarGridSpec(
            num_scalar_prefetch=0,
            grid=(nb, nt),
            in_specs=[
                pl.BlockSpec((Tc, tb, 4 * Hp), lambda bi, ti: (ti, bi, 0)),
                pl.BlockSpec((Hp, 4 * Hp), lambda bi, ti: (0, 0)),
            ],
            out_specs=pl.BlockSpec((Tc, tb, Hp), lambda bi, ti: (ti, bi, 0)),
            scratch_shapes=[pltpu.VMEM((tb, Hp), jnp.float32),   # h
                            pltpu.VMEM((tb, Hp), jnp.float32)],  # c
        ),
        compiler_params=pltpu.CompilerParams(
            dimension_semantics=("parallel", "arbitrary"),
            vmem_limit_bytes=_vmem_limit(resident2)),
    )(gates_x, w_hh)

    # ---- stage 3: hidden -> vocab projection (parallel matmul) ------------
    # Drop padded timesteps, transpose the small (T, Bp, Hp) tensor (never
    # the V-sized one), and use a single M tile when it fits so W_out is
    # streamed from HBM exactly once.
    hs_bt = jnp.transpose(hs[:T], (1, 0, 2)).reshape(Bp * T, Hp).astype(md)
    m_rows = Bp * T
    max_tm3 = m_rows if m_rows * Hp * jnp.dtype(md).itemsize <= (4 << 20) else 256
    logits = _matmul_bias(hs_bt, w_out, b_out, max_tm=max_tm3)       # (Bp*T, V)
    logits = logits.reshape(Bp, T, V)

    return logits[:B]                                                # (B, T, V)


def decoder_rnn_reference(features, captions, params,
                          matmul_dtype=jnp.float32):
    """Pure-JAX reference (same math, same matmul operand dtype) for a
    correctness check.  Gate order is the original PyTorch [i, f, g, o]."""
    md = matmul_dtype
    emb = params["embedding"][captions[:, :-1]]
    x = jnp.concatenate([features[:, None, :], emb], axis=1).astype(jnp.float32)
    B = x.shape[0]
    H = params["W_hh"].shape[0]
    w_ih = params["W_ih"].astype(md)
    w_hh = params["W_hh"].astype(md)
    w_out = params["W_out"].astype(md)

    def step(carry, x_t):
        h, c = carry
        gates = (jnp.dot(x_t.astype(md), w_ih, preferred_element_type=jnp.float32)
                 + jnp.dot(h.astype(md), w_hh, preferred_element_type=jnp.float32)
                 + params["b"][0])
        i_g = jax.nn.sigmoid(gates[:, 0 * H:1 * H])
        f_g = jax.nn.sigmoid(gates[:, 1 * H:2 * H])
        g_g = jnp.tanh(gates[:, 2 * H:3 * H])
        o_g = jax.nn.sigmoid(gates[:, 3 * H:4 * H])
        c_new = f_g * c + i_g * g_g
        h_new = o_g * jnp.tanh(c_new)
        return (h_new, c_new), h_new

    h0 = jnp.zeros((B, H), jnp.float32)
    c0 = jnp.zeros((B, H), jnp.float32)
    _, hs = jax.lax.scan(step, (h0, c0), jnp.transpose(x, (1, 0, 2)))
    logits = (jnp.dot(hs.astype(md), w_out, preferred_element_type=jnp.float32)
              + params["b_out"][0])
    return jnp.transpose(logits, (1, 0, 2))


def init_params(key, embed_size, hidden_size, vocab_size):
    ks = jax.random.split(key, 7)
    scale = 1.0 / jnp.sqrt(hidden_size)
    return {
        # nn.Embedding default: N(0, 1)
        "embedding": jax.random.normal(ks[0], (vocab_size, embed_size), jnp.float32),
        # nn.LSTM weights stored transposed: (E, 4H), (H, 4H); gate order i,f,g,o
        "W_ih": jax.random.uniform(ks[1], (embed_size, 4 * hidden_size),
                                   jnp.float32, -scale, scale),
        "W_hh": jax.random.uniform(ks[2], (hidden_size, 4 * hidden_size),
                                   jnp.float32, -scale, scale),
        # combined b_ih + b_hh
        "b": jax.random.uniform(ks[3], (1, 4 * hidden_size),
                                jnp.float32, -scale, scale),
        # nn.Linear(hidden, vocab) stored transposed: (H, V)
        "W_out": jax.random.uniform(ks[4], (hidden_size, vocab_size),
                                    jnp.float32, -scale, scale),
        "b_out": jax.random.uniform(ks[5], (1, vocab_size),
                                    jnp.float32, -scale, scale),
    }


# TODO(synk): DecoderRNN.sample() (autoregressive greedy decode with a
# host-side python loop) is not implemented; only the training forward is.

if __name__ == "__main__":
    embed_size, hidden_size, vocab_size = 32, 32, 128
    batch, cap_len = 2, 9   # forward sees T = cap_len (drops last token, adds features)

    key = jax.random.PRNGKey(0)
    k_param, k_feat, k_cap = jax.random.split(key, 3)

    params = init_params(k_param, embed_size, hidden_size, vocab_size)
    features = jax.random.normal(k_feat, (batch, embed_size), jnp.float32)
    captions = jax.random.randint(k_cap, (batch, cap_len), 0, vocab_size, jnp.int32)

    out = decoder_rnn_forward(features, captions, params,
                              matmul_dtype=jnp.bfloat16)
    out = jax.block_until_ready(out)

    # Reference uses the same bf16 matmul-operand casts (f32 accumulation /
    # elementwise), so only accumulation-order differences remain.
    ref = decoder_rnn_reference(features, captions, params,
                                matmul_dtype=jnp.bfloat16)
    assert out.shape == (batch, cap_len, vocab_size), out.shape
    assert jnp.allclose(out, ref, atol=2e-3, rtol=2e-3), "mismatch vs reference"

    print("KERNEL_OK")
</pallas_src>

<mosaic_0001>
module attributes {stable_mosaic.version = 11 : i64} {
  func.func @_matmul_bias_kernel(%arg0: i32, %arg1: i32, %arg2: memref<128x32xbf16, #tpu.memory_space<vmem>>, %arg3: memref<32x512xbf16, #tpu.memory_space<vmem>>, %arg4: memref<1x512xf32, #tpu.memory_space<vmem>>, %arg5: memref<128x512xf32, #tpu.memory_space<vmem>>) attributes {dimension_semantics = [#tpu.dimension_semantics<parallel>, #tpu.dimension_semantics<parallel>], iteration_bounds = array<i64: 1, 1>, scalar_prefetch = 0 : i64, scratch_operands = 0 : i64, tpu.core_type = #tpu.core_type<tc>, window_params = [{transform_indices = @transform_0, window_bounds = array<i64: 128, 32>}, {transform_indices = @transform_1, window_bounds = array<i64: 32, 512>}, {transform_indices = @transform_2, window_bounds = array<i64: 1, 512>}, {transform_indices = @transform_3, window_bounds = array<i64: 128, 512>}]} {
    %c0 = arith.constant 0 : index
    %c0_0 = arith.constant 0 : index
    %0 = vector.load %arg2[%c0, %c0_0] : memref<128x32xbf16, #tpu.memory_space<vmem>>, vector<128x32xbf16>
    %c0_1 = arith.constant 0 : index
    %c0_2 = arith.constant 0 : index
    %1 = vector.load %arg3[%c0_1, %c0_2] : memref<32x512xbf16, #tpu.memory_space<vmem>>, vector<32x512xbf16>
    %cst = arith.constant dense<0.000000e+00> : vector<128x512xf32>
    %2 = tpu.matmul %0, %1, %cst {dimension_numbers = #tpu.dot_dimension_numbers<[1], [0], [0], [1], [0, 0, 1, 1], [], []>} : vector<128x32xbf16>, vector<32x512xbf16>, vector<128x512xf32> -> vector<128x512xf32>
    %c0_3 = arith.constant 0 : index
    %c0_4 = arith.constant 0 : index
    %3 = vector.load %arg4[%c0_3, %c0_4] : memref<1x512xf32, #tpu.memory_space<vmem>>, vector<1x512xf32>
    %4 = vector.broadcast %3 : vector<1x512xf32> to vector<128x512xf32>
    %5 = arith.addf %2, %4 : vector<128x512xf32>
    %c0_5 = arith.constant 0 : index
    %c0_6 = arith.constant 0 : index
    %6 = vector.load %arg5[%c0_5, %c0_6] : memref<128x512xf32, #tpu.memory_space<vmem>>, vector<128x512xf32>
    tpu.vector_store %arg5[%c0_5, %c0_6], %5 {strides = array<i32>} : memref<128x512xf32, #tpu.memory_space<vmem>>, vector<128x512xf32>,
    return
  }
  func.func @transform_0(%arg0: i32, %arg1: i32) -> (i32, i32) {
    %c0_i32 = arith.constant 0 : i32
    %c0_i32_0 = arith.constant 0 : i32
    return %arg0, %c0_i32 : i32, i32
  }
  func.func @transform_1(%arg0: i32, %arg1: i32) -> (i32, i32) {
    %c0_i32 = arith.constant 0 : i32
    %c0_i32_0 = arith.constant 0 : i32
    return %c0_i32, %arg1 : i32, i32
  }
  func.func @transform_2(%arg0: i32, %arg1: i32) -> (i32, i32) {
    %c0_i32 = arith.constant 0 : i32
    %c0_i32_0 = arith.constant 0 : i32
    return %c0_i32, %arg1 : i32, i32
  }
  func.func @transform_3(%arg0: i32, %arg1: i32) -> (i32, i32) {
    %c0_i32 = arith.constant 0 : i32
    return %arg0, %arg1 : i32, i32
  }
}

</mosaic_0001>

<llo_original>
// kernel: tpu_custom_call.1
$region0: #{tpu_custom_call.1}
  #allocation0 [shape = 'u32[]', space=smem, size = 0x4, offset = 0x4, fixed_abs, tag = 'smem constant byte address 0x4 - core index']
  #allocation1 [shape = 'u32[144,128]{1,0:T(1,128)}', space=vmem, size = 0x12000, scoped, tag = 'internal scratch']
  %s0 = inlined_call_operand.vmem [shape: bf16[128,32], index: 0, kind: input, shape index: {}]
  %s1 = inlined_call_operand.vmem [shape: bf16[32,512], index: 1, kind: input, shape index: {}]
  %s2 = inlined_call_operand.vmem [shape: f32[1,512], index: 2, kind: input, shape index: {}]
  %s3 = inlined_call_operand.hbm [shape: f32[128,512], index: 3, kind: output, shape index: {}]
  %s4 = sld [smem:[#allocation0]]
  $region22: #{tpu_custom_call.1} parent=0
    _
  %s6 = ssub.s32 1, %s4
  %s7 = scalar_select 0, %s6, %s4
  $region1: #{tpu_custom_call.1} parent=0
    #allocation2 [shape = 'u8[262144]{0}', space=vmem, size = 0x40000, scoped, tag = 'output window, operand 0, single buffered']
    #allocation3 [shape = 's32[1]{0}', space=sflag, size = 0x4, scoped, tag = 'scoped memory for tpu_custom_call.1']
    %8 = vsyncpa [#allocation3], 0
    // Predicated region
    $region2: #{tpu_custom_call.1} parent=1 // pred_check
      _
    $region3: #{tpu_custom_call.1} parent=1 // pred_check_branch
      %10 = sbr.rel (0) target = $region5
    $region4: #{tpu_custom_call.1} parent=1 // pred_region
      _
    $region5: #{tpu_custom_call.1} parent=1 // pred_fallthru
      _
    // Predicated region
    $region6: #{tpu_custom_call.1} parent=1 // pred_check
      _
    $region7: #{tpu_custom_call.1} parent=1 // pred_check_branch
      %12 = sbr.rel (0) target = $region9
    $region8: #{tpu_custom_call.1} parent=1 // pred_region
      _
    $region9: #{tpu_custom_call.1} parent=1 // pred_fallthru
      _
    // Predicated region
    $region10: #{tpu_custom_call.1} parent=1 // pred_check
      _
    $region11: #{tpu_custom_call.1} parent=1 // pred_check_branch
      %14 = sbr.rel (0) target = $region13
    $region12: #{tpu_custom_call.1} parent=1 // pred_region
      _
    $region13: #{tpu_custom_call.1} parent=1 // pred_fallthru
      _
    %v16 = vld [vmem:[%s0] sm:$0xf]
    %v17 = vld [vmem:[%s0 + $0x4] sm:$0xf]
    %v18 = vld [vmem:[%s0 + $0x8] sm:$0xf]
    %v19 = vld [vmem:[%s0 + $0xc] sm:$0xf]
    %v20 = vld [vmem:[%s0 + $0x10] sm:$0xf]
    %v21 = vld [vmem:[%s0 + $0x14] sm:$0xf]
    %v22 = vld [vmem:[%s0 + $0x18] sm:$0xf]
    %v23 = vld [vmem:[%s0 + $0x1c] sm:$0xf]
    %v24 = vld [vmem:[%s0 + $0x20] sm:$0xf]
    %v25 = vld [vmem:[%s0 + $0x24] sm:$0xf]
    %v26 = vld [vmem:[%s0 + $0x28] sm:$0xf]
    %v27 = vld [vmem:[%s0 + $0x2c] sm:$0xf]
    %v28 = vld [vmem:[%s0 + $0x30] sm:$0xf]
    %v29 = vld [vmem:[%s0 + $0x34] sm:$0xf]
    %v30 = vld [vmem:[%s0 + $0x38] sm:$0xf]
    %v31 = vld [vmem:[%s0 + $0x3c] sm:$0xf]
    %v32 = vld [vmem:[%s1] sm:$0xff]
    %v33 = vld [vmem:[%s1 + $0x8] sm:$0xff]
    %v34 = vld [vmem:[%s1 + $0x10] sm:$0xff]
    %v35 = vld [vmem:[%s1 + $0x18] sm:$0xff]
    %v36 = vld [vmem:[%s1 + $0x20] sm:$0xff]
    %v37 = vld [vmem:[%s1 + $0x28] sm:$0xff]
    %v38 = vld [vmem:[%s1 + $0x30] sm:$0xff]
    %v39 = vld [vmem:[%s1 + $0x38] sm:$0xff]
    %v40 = vld [vmem:[%s2] sm:$0xf]
    %v42 = vlaneseq
    %v43 = vshrl.u32 %v42, 7
    %v44 = vsub.s32 0, %v43
    %v45 = vrot.slane %v40, %v44
    %v46 = vlaneseq
    %v47 = vshrl.u32 %v46, 7
    %v48 = vsub.s32 1, %v47
    %v49 = vrot.slane %v40, %v48
    %v50 = vlaneseq
    %v51 = vshrl.u32 %v50, 7
    %v52 = vsub.s32 2, %v51
    %v53 = vrot.slane %v40, %v52
    %v54 = vlaneseq
    %v55 = vshrl.u32 %v54, 7
    %v56 = vsub.s32 3, %v55
    %v57 = vrot.slane %v40, %v56
    %v78 = vunpack.c.l.b16 %v16
    %v79 = vunpack.c.l.b16 %v17
    %v80 = vunpack.c.l.b16 %v18
    %v81 = vunpack.c.l.b16 %v19
    %v82 = vunpack.c.l.b16 %v20
    %v83 = vunpack.c.l.b16 %v21
    %v84 = vunpack.c.l.b16 %v22
    %v85 = vunpack.c.l.b16 %v23
    %v86 = vunpack.c.l.b16 %v24
    %v87 = vunpack.c.l.b16 %v25
    %v88 = vunpack.c.l.b16 %v26
    %v89 = vunpack.c.l.b16 %v27
    %v90 = vunpack.c.l.b16 %v28
    %v91 = vunpack.c.l.b16 %v29
    %v92 = vunpack.c.l.b16 %v30
    %v93 = vunpack.c.l.b16 %v31
    %v94 = vpack.c.b16 %v79, %v78
    %v95 = vpack.c.b16 %v81, %v80
    %v96 = vpack.c.b16 %v83, %v82
    %v97 = vpack.c.b16 %v85, %v84
    %v98 = vpack.c.b16 %v87, %v86
    %v99 = vpack.c.b16 %v89, %v88
    %v100 = vpack.c.b16 %v91, %v90
    %v101 = vpack.c.b16 %v93, %v92
    %v110 = vunpack.c.l.b16 %v32
    %v111 = vunpack.c.h.b16 %v32
    %v112 = vunpack.c.l.b16 %v33
    %v113 = vunpack.c.h.b16 %v33
    %v114 = vunpack.c.l.b16 %v34
    %v115 = vunpack.c.h.b16 %v34
    %v116 = vunpack.c.l.b16 %v35
    %v117 = vunpack.c.h.b16 %v35
    %v118 = vunpack.c.l.b16 %v36
    %v119 = vunpack.c.h.b16 %v36
    %v120 = vunpack.c.l.b16 %v37
    %v121 = vunpack.c.h.b16 %v37
    %v122 = vunpack.c.l.b16 %v38
    %v123 = vunpack.c.h.b16 %v38
    %v124 = vunpack.c.l.b16 %v39
    %v125 = vunpack.c.h.b16 %v39
    %v126 = vpack.c.b16 %v114, %v110
    %v127 = vpack.c.b16 %v115, %v111
    %v128 = vpack.c.b16 %v116, %v112
    %v129 = vpack.c.b16 %v117, %v113
    %v130 = vpack.c.b16 %v122, %v118
    %v131 = vpack.c.b16 %v123, %v119
    %v132 = vpack.c.b16 %v124, %v120
    %v133 = vpack.c.b16 %v125, %v121
    %vm142 = vcmask 261120
    %v144 = vsel %vm142, %v94, 0
    %v147 = vsel %vm142, %v95, 0
    %v150 = vsel %vm142, %v96, 0
    %v153 = vsel %vm142, %v97, 0
    %v156 = vsel %vm142, %v98, 0
    %v159 = vsel %vm142, %v99, 0
    %v162 = vsel %vm142, %v100, 0
    %v165 = vsel %vm142, %v101, 0
    %167 = vmatprep.subr.bf16.mxu0 %v127
    %168 = vmatpush1.bf16.msra.mxu0 %v126
    %169 = vmatprep.subr.bf16.mxu0 %v131
    %170 = vmatpush1.bf16.msra.mxu0 %v130
    %171 = vmatprep.subr.bf16.mxu0 0
    %172 = vmatpush1.bf16.msra.mxu0 0
    %173 = vmatprep.subr.bf16.mxu0 0
    %174 = vmatpush1.bf16.msra.mxu0 0
    %175 = vmatprep.subr.bf16.mxu0 0
    %176 = vmatpush1.bf16.msra.mxu0 0
    %177 = vmatprep.subr.bf16.mxu0 0
    %178 = vmatpush1.bf16.msra.mxu0 0
    %179 = vmatprep.subr.bf16.mxu0 0
    %180 = vmatpush1.bf16.msra.mxu0 0
    %181 = vmatprep.subr.bf16.mxu0 0
    %182 = vmatpush1.bf16.msra.mxu0 0
    %183 = vmatprep.subr.bf16.mxu0 0
    %184 = vmatpush1.bf16.msra.mxu0 0
    %185 = vmatprep.subr.bf16.mxu0 0
    %186 = vmatpush1.bf16.msra.mxu0 0
    %187 = vmatprep.subr.bf16.mxu0 0
    %188 = vmatpush1.bf16.msra.mxu0 0
    %189 = vmatprep.subr.bf16.mxu0 0
    %190 = vmatpush1.bf16.msra.mxu0 0
    %191 = vmatprep.subr.bf16.mxu0 0
    %192 = vmatpush1.bf16.msra.mxu0 0
    %193 = vmatprep.subr.bf16.mxu0 0
    %194 = vmatpush1.bf16.msra.mxu0 0
    %195 = vmatprep.subr.bf16.mxu0 0
    %196 = vmatpush1.bf16.msra.mxu0 0
    %197 = vmatprep.subr.bf16.mxu0 0
    %198 = vmatpush1.bf16.msra.mxu0 0
    %199 = vmatprep.mubr.bf16.mxu0 0
    %200 = vmatmul.mubr.bf16.gmra.mrb[0].mxu0 %v144
    %v201 = vpop.f32.mrb[0].mxu0
    %v202 = vadd.f32 %v45, %v201
    %v203 = vpop.f32.mrb[0].mxu0
    %v204 = vadd.f32 %v49, %v203
    %v205 = vpop.f32.mrb[0].mxu0
    %v206 = vadd.f32 %v45, %v205
    %v207 = vpop.f32.mrb[0].mxu0
    %v208 = vadd.f32 %v49, %v207
    %209 = vmatprep.mubr.bf16.mxu0 0
    %210 = vmatmul.mubr.bf16.gmra.mrb[0].mxu0 %v147
    %v211 = vpop.f32.mrb[0].mxu0
    %v212 = vadd.f32 %v45, %v211
    %v213 = vpop.f32.mrb[0].mxu0
    %v214 = vadd.f32 %v49, %v213
    %v215 = vpop.f32.mrb[0].mxu0
    %v216 = vadd.f32 %v45, %v215
    %v217 = vpop.f32.mrb[0].mxu0
    %v218 = vadd.f32 %v49, %v217
    %219 = vmatprep.mubr.bf16.mxu0 0
    %220 = vmatmul.mubr.bf16.gmra.mrb[0].mxu0 %v150
    %v221 = vpop.f32.mrb[0].mxu0
    %v222 = vadd.f32 %v45, %v221
    %v223 = vpop.f32.mrb[0].mxu0
    %v224 = vadd.f32 %v49, %v223
    %v225 = vpop.f32.mrb[0].mxu0
    %v226 = vadd.f32 %v45, %v225
    %v227 = vpop.f32.mrb[0].mxu0
    %v228 = vadd.f32 %v49, %v227
    %229 = vmatprep.mubr.bf16.mxu0 0
    %230 = vmatmul.mubr.bf16.gmra.mrb[0].mxu0 %v153
    %v231 = vpop.f32.mrb[0].mxu0
    %v232 = vadd.f32 %v45, %v231
    %v233 = vpop.f32.mrb[0].mxu0
    %v234 = vadd.f32 %v49, %v233
    %v235 = vpop.f32.mrb[0].mxu0
    %v236 = vadd.f32 %v45, %v235
    %v237 = vpop.f32.mrb[0].mxu0
    %v238 = vadd.f32 %v49, %v237
    %239 = vmatprep.mubr.bf16.mxu0 0
    %240 = vmatmul.mubr.bf16.gmra.mrb[0].mxu0 %v156
    %v241 = vpop.f32.mrb[0].mxu0
    %v242 = vadd.f32 %v45, %v241
    %v243 = vpop.f32.mrb[0].mxu0
    %v244 = vadd.f32 %v49, %v243
    %v245 = vpop.f32.mrb[0].mxu0
    %v246 = vadd.f32 %v45, %v245
    %v247 = vpop.f32.mrb[0].mxu0
    %v248 = vadd.f32 %v49, %v247
    %249 = vmatprep.mubr.bf16.mxu0 0
    %250 = vmatmul.mubr.bf16.gmra.mrb[0].mxu0 %v159
    %v251 = vpop.f32.mrb[0].mxu0
    %v252 = vadd.f32 %v45, %v251
    %v253 = vpop.f32.mrb[0].mxu0
    %v254 = vadd.f32 %v49, %v253
    %v255 = vpop.f32.mrb[0].mxu0
    %v256 = vadd.f32 %v45, %v255
    %v257 = vpop.f32.mrb[0].mxu0
    %v258 = vadd.f32 %v49, %v257
    %259 = vmatprep.mubr.bf16.mxu0 0
    %260 = vmatmul.mubr.bf16.gmra.mrb[0].mxu0 %v162
    %v261 = vpop.f32.mrb[0].mxu0
    %v262 = vadd.f32 %v45, %v261
    %v263 = vpop.f32.mrb[0].mxu0
    %v264 = vadd.f32 %v49, %v263
    %v265 = vpop.f32.mrb[0].mxu0
    %v266 = vadd.f32 %v45, %v265
    %v267 = vpop.f32.mrb[0].mxu0
    %v268 = vadd.f32 %v49, %v267
    %269 = vmatprep.mubr.bf16.mxu0 0
    %270 = vmatmul.mubr.bf16.gmra.mrb[0].mxu0 %v165
    %v271 = vpop.f32.mrb[0].mxu0
    %v272 = vadd.f32 %v45, %v271
    %v273 = vpop.f32.mrb[0].mxu0
    %v274 = vadd.f32 %v49, %v273
    %v275 = vpop.f32.mrb[0].mxu0
    %v276 = vadd.f32 %v45, %v275
    %v277 = vpop.f32.mrb[0].mxu0
    %v278 = vadd.f32 %v49, %v277
    %279 = vdwg.mxu0
    %280 = vmatprep.subr.bf16.mxu0 %v129
    %281 = vmatpush1.bf16.msra.mxu0 %v128
    %282 = vmatprep.subr.bf16.mxu0 %v133
    %283 = vmatpush1.bf16.msra.mxu0 %v132
    %284 = vmatprep.subr.bf16.mxu0 0
    %285 = vmatpush1.bf16.msra.mxu0 0
    %286 = vmatprep.subr.bf16.mxu0 0
    %287 = vmatpush1.bf16.msra.mxu0 0
    %288 = vmatprep.subr.bf16.mxu0 0
    %289 = vmatpush1.bf16.msra.mxu0 0
    %290 = vmatprep.subr.bf16.mxu0 0
    %291 = vmatpush1.bf16.msra.mxu0 0
    %292 = vmatprep.subr.bf16.mxu0 0
    %293 = vmatpush1.bf16.msra.mxu0 0
    %294 = vmatprep.subr.bf16.mxu0 0
    %295 = vmatpush1.bf16.msra.mxu0 0
    %296 = vmatprep.subr.bf16.mxu0 0
    %297 = vmatpush1.bf16.msra.mxu0 0
    %298 = vmatprep.subr.bf16.mxu0 0
    %299 = vmatpush1.bf16.msra.mxu0 0
    %300 = vmatprep.subr.bf16.mxu0 0
    %301 = vmatpush1.bf16.msra.mxu0 0
    %302 = vmatprep.subr.bf16.mxu0 0
    %303 = vmatpush1.bf16.msra.mxu0 0
    %304 = vmatprep.subr.bf16.mxu0 0
    %305 = vmatpush1.bf16.msra.mxu0 0
    %306 = vmatprep.subr.bf16.mxu0 0
    %307 = vmatpush1.bf16.msra.mxu0 0
    %308 = vmatprep.subr.bf16.mxu0 0
    %309 = vmatpush1.bf16.msra.mxu0 0
    %310 = vmatprep.subr.bf16.mxu0 0
    %311 = vmatpush1.bf16.msra.mxu0 0
    %312 = vmatprep.mubr.bf16.mxu0 0
    %313 = vmatmul.mubr.bf16.gmra.mrb[0].mxu0 %v144
    %v314 = vpop.f32.mrb[0].mxu0
    %v315 = vadd.f32 %v53, %v314
    %v316 = vpop.f32.mrb[0].mxu0
    %v317 = vadd.f32 %v57, %v316
    %v318 = vpop.f32.mrb[0].mxu0
    %v319 = vadd.f32 %v53, %v318
    %v320 = vpop.f32.mrb[0].mxu0
    %v321 = vadd.f32 %v57, %v320
    %322 = vmatprep.mubr.bf16.mxu0 0
    %323 = vmatmul.mubr.bf16.gmra.mrb[0].mxu0 %v147
    %v324 = vpop.f32.mrb[0].mxu0
    %v325 = vadd.f32 %v53, %v324
    %v326 = vpop.f32.mrb[0].mxu0
    %v327 = vadd.f32 %v57, %v326
    %v328 = vpop.f32.mrb[0].mxu0
    %v329 = vadd.f32 %v53, %v328
    %v330 = vpop.f32.mrb[0].mxu0
    %v331 = vadd.f32 %v57, %v330
    %332 = vmatprep.mubr.bf16.mxu0 0
    %333 = vmatmul.mubr.bf16.gmra.mrb[0].mxu0 %v150
    %v334 = vpop.f32.mrb[0].mxu0
    %v335 = vadd.f32 %v53, %v334
    %v336 = vpop.f32.mrb[0].mxu0
    %v337 = vadd.f32 %v57, %v336
    %v338 = vpop.f32.mrb[0].mxu0
    %v339 = vadd.f32 %v53, %v338
    %v340 = vpop.f32.mrb[0].mxu0
    %v341 = vadd.f32 %v57, %v340
    %342 = vmatprep.mubr.bf16.mxu0 0
    %343 = vmatmul.mubr.bf16.gmra.mrb[0].mxu0 %v153
    %v344 = vpop.f32.mrb[0].mxu0
    %v345 = vadd.f32 %v53, %v344
    %v346 = vpop.f32.mrb[0].mxu0
    %v347 = vadd.f32 %v57, %v346
    %v348 = vpop.f32.mrb[0].mxu0
    %v349 = vadd.f32 %v53, %v348
    %v350 = vpop.f32.mrb[0].mxu0
    %v351 = vadd.f32 %v57, %v350
    %352 = vmatprep.mubr.bf16.mxu0 0
    %353 = vmatmul.mubr.bf16.gmra.mrb[0].mxu0 %v156
    %v354 = vpop.f32.mrb[0].mxu0
    %v355 = vadd.f32 %v53, %v354
    %v356 = vpop.f32.mrb[0].mxu0
    %v357 = vadd.f32 %v57, %v356
    %v358 = vpop.f32.mrb[0].mxu0
    %v359 = vadd.f32 %v53, %v358
    %v360 = vpop.f32.mrb[0].mxu0
    %v361 = vadd.f32 %v57, %v360
    %362 = vmatprep.mubr.bf16.mxu0 0
    %363 = vmatmul.mubr.bf16.gmra.mrb[0].mxu0 %v159
    %v364 = vpop.f32.mrb[0].mxu0
    %v365 = vadd.f32 %v53, %v364
    %v366 = vpop.f32.mrb[0].mxu0
    %v367 = vadd.f32 %v57, %v366
    %v368 = vpop.f32.mrb[0].mxu0
    %v369 = vadd.f32 %v53, %v368
    %v370 = vpop.f32.mrb[0].mxu0
    %v371 = vadd.f32 %v57, %v370
    %372 = vmatprep.mubr.bf16.mxu0 0
    %373 = vmatmul.mubr.bf16.gmra.mrb[0].mxu0 %v162
    %v374 = vpop.f32.mrb[0].mxu0
    %v375 = vadd.f32 %v53, %v374
    %v376 = vpop.f32.mrb[0].mxu0
    %v377 = vadd.f32 %v57, %v376
    %v378 = vpop.f32.mrb[0].mxu0
    %v379 = vadd.f32 %v53, %v378
    %v380 = vpop.f32.mrb[0].mxu0
    %v381 = vadd.f32 %v57, %v380
    %382 = vmatprep.mubr.bf16.mxu0 0
    %383 = vmatmul.mubr.bf16.gmra.mrb[0].mxu0 %v165
    %v384 = vpop.f32.mrb[0].mxu0
    %v385 = vadd.f32 %v53, %v384
    %v386 = vpop.f32.mrb[0].mxu0
    %v387 = vadd.f32 %v57, %v386
    %v388 = vpop.f32.mrb[0].mxu0
    %v389 = vadd.f32 %v53, %v388
    %v390 = vpop.f32.mrb[0].mxu0
    %v391 = vadd.f32 %v57, %v390
    %392 = vdwg.mxu0
    %393 = vst [vmem:[#allocation2] sm:$0xff] %v202
    %394 = vst [vmem:[#allocation2 + $0x8] sm:$0xff] %v204
    %395 = vst [vmem:[#allocation2 + $0x10] sm:$0xff] %v315
    %396 = vst [vmem:[#allocation2 + $0x18] sm:$0xff] %v317
    %397 = vst [vmem:[#allocation2 + $0x20] sm:$0xff] %v206
    %398 = vst [vmem:[#allocation2 + $0x28] sm:$0xff] %v208
    %399 = vst [vmem:[#allocation2 + $0x30] sm:$0xff] %v319
    %400 = vst [vmem:[#allocation2 + $0x38] sm:$0xff] %v321
    %401 = vst [vmem:[#allocation2 + $0x40] sm:$0xff] %v212
    %402 = vst [vmem:[#allocation2 + $0x48] sm:$0xff] %v214
    %403 = vst [vmem:[#allocation2 + $0x50] sm:$0xff] %v325
    %404 = vst [vmem:[#allocation2 + $0x58] sm:$0xff] %v327
    %405 = vst [vmem:[#allocation2 + $0x60] sm:$0xff] %v216
    %406 = vst [vmem:[#allocation2 + $0x68] sm:$0xff] %v218
    %407 = vst [vmem:[#allocation2 + $0x70] sm:$0xff] %v329
    %408 = vst [vmem:[#allocation2 + $0x78] sm:$0xff] %v331
    %409 = vst [vmem:[#allocation2 + $0x80] sm:$0xff] %v222
    %410 = vst [vmem:[#allocation2 + $0x88] sm:$0xff] %v224
    %411 = vst [vmem:[#allocation2 + $0x90] sm:$0xff] %v335
    %412 = vst [vmem:[#allocation2 + $0x98] sm:$0xff] %v337
    %413 = vst [vmem:[#allocation2 + $0xa0] sm:$0xff] %v226
    %414 = vst [vmem:[#allocation2 + $0xa8] sm:$0xff] %v228
    %415 = vst [vmem:[#allocation2 + $0xb0] sm:$0xff] %v339
    %416 = vst [vmem:[#allocation2 + $0xb8] sm:$0xff] %v341
    %417 = vst [vmem:[#allocation2 + $0xc0] sm:$0xff] %v232
    %418 = vst [vmem:[#allocation2 + $0xc8] sm:$0xff] %v234
    %419 = vst [vmem:[#allocation2 + $0xd0] sm:$0xff] %v345
    %420 = vst [vmem:[#allocation2 + $0xd8] sm:$0xff] %v347
    %421 = vst [vmem:[#allocation2 + $0xe0] sm:$0xff] %v236
    %422 = vst [vmem:[#allocation2 + $0xe8] sm:$0xff] %v238
    %423 = vst [vmem:[#allocation2 + $0xf0] sm:$0xff] %v349
    %424 = vst [vmem:[#allocation2 + $0xf8] sm:$0xff] %v351
    %425 = vst [vmem:[#allocation2 + $0x100] sm:$0xff] %v242
    %426 = vst [vmem:[#allocation2 + $0x108] sm:$0xff] %v244
    %427 = vst [vmem:[#allocation2 + $0x110] sm:$0xff] %v355
    %428 = vst [vmem:[#allocation2 + $0x118] sm:$0xff] %v357
    %429 = vst [vmem:[#allocation2 + $0x120] sm:$0xff] %v246
    %430 = vst [vmem:[#allocation2 + $0x128] sm:$0xff] %v248
    %431 = vst [vmem:[#allocation2 + $0x130] sm:$0xff] %v359
    %432 = vst [vmem:[#allocation2 + $0x138] sm:$0xff] %v361
    %433 = vst [vmem:[#allocation2 + $0x140] sm:$0xff] %v252
    %434 = vst [vmem:[#allocation2 + $0x148] sm:$0xff] %v254
    %435 = vst [vmem:[#allocation2 + $0x150] sm:$0xff] %v365
    %436 = vst [vmem:[#allocation2 + $0x158] sm:$0xff] %v367
    %437 = vst [vmem:[#allocation2 + $0x160] sm:$0xff] %v256
    %438 = vst [vmem:[#allocation2 + $0x168] sm:$0xff] %v258
    %439 = vst [vmem:[#allocation2 + $0x170] sm:$0xff] %v369
    %440 = vst [vmem:[#allocation2 + $0x178] sm:$0xff] %v371
    %441 = vst [vmem:[#allocation2 + $0x180] sm:$0xff] %v262
    %442 = vst [vmem:[#allocation2 + $0x188] sm:$0xff] %v264
    %443 = vst [vmem:[#allocation2 + $0x190] sm:$0xff] %v375
    %444 = vst [vmem:[#allocation2 + $0x198] sm:$0xff] %v377
    %445 = vst [vmem:[#allocation2 + $0x1a0] sm:$0xff] %v266
    %446 = vst [vmem:[#allocation2 + $0x1a8] sm:$0xff] %v268
    %447 = vst [vmem:[#allocation2 + $0x1b0] sm:$0xff] %v379
    %448 = vst [vmem:[#allocation2 + $0x1b8] sm:$0xff] %v381
    %449 = vst [vmem:[#allocation2 + $0x1c0] sm:$0xff] %v272
    %450 = vst [vmem:[#allocation2 + $0x1c8] sm:$0xff] %v274
    %451 = vst [vmem:[#allocation2 + $0x1d0] sm:$0xff] %v385
    %452 = vst [vmem:[#allocation2 + $0x1d8] sm:$0xff] %v387
    %453 = vst [vmem:[#allocation2 + $0x1e0] sm:$0xff] %v276
    %454 = vst [vmem:[#allocation2 + $0x1e8] sm:$0xff] %v278
    %455 = vst [vmem:[#allocation2 + $0x1f0] sm:$0xff] %v389
    %456 = vst [vmem:[#allocation2 + $0x1f8] sm:$0xff] %v391
    // Predicated region
    $region14: #{tpu_custom_call.1} parent=1 // pred_check
      _
    $region15: #{tpu_custom_call.1} parent=1 // pred_check_branch
      %458 = sbr.rel (0) target = $region17
    $region16: #{tpu_custom_call.1} parent=1 // pred_region
      %s460 = ssub.s32 8192, 8192
      %461 = vsyncadd [#allocation3], %s460
      %s462 = sshll.u32 [#allocation2], 4
      %s463 = int_to_ptr.vmem [resolvable:$true] %s462
      %468 = dma.vmem_to_hbm [thread:$0]  %s463, 8192, %s3, [#allocation3], 512, 512, 32
    $region17: #{tpu_custom_call.1} parent=1 // pred_fallthru
      _
    // Predicated region
    $region18: #{tpu_custom_call.1} parent=1 // pred_check
      _
    $region19: #{tpu_custom_call.1} parent=1 // pred_check_branch
      %470 = sbr.rel (0) target = $region21
    $region20: #{tpu_custom_call.1} parent=1 // pred_region
      %471 = dma.done [#allocation3], 8192
    $region21: #{tpu_custom_call.1} parent=1 // pred_fallthru
      _
    %472 = vsyncpa [#allocation3], 1

</llo_original>
